<compile_context>
chip_gen: v7x
topology: tpu7x:2x2x1
jax: 0.10.0
libtpu: 0.0.40
codegen_flags: <defaults>
</compile_context>

<pallas_src>
import functools

import jax
import jax.numpy as jnp
from jax.experimental import pallas as pl
from jax.experimental.pallas import tpu as pltpu


ROW_TILE_CAP = 1024          # rows per grid step (f32 activations; ~2.5 MB VMEM)
MATMUL_DTYPE = jnp.bfloat16  # MXU operand dtype; accumulation stays f32


def _round_up(x, m):
    return ((x + m - 1) // m) * m


def _choose_tm(m, cap=ROW_TILE_CAP):
    # biggest tile <= cap; keep >=2 grid steps when possible (v7x: 2 TCs/chip)
    half = max(m // 2, 16)
    return min(cap, _round_up(half, 16))


def _pad_rows(a, rows):
    return a if a.shape[0] == rows else jnp.pad(a, ((0, rows - a.shape[0]), (0, 0)))


def _pad2d(a, rows, cols):
    return jnp.pad(a, ((0, rows - a.shape[0]), (0, cols - a.shape[1])))


def _leaky(y):
    return jnp.maximum(y, 0.1 * y)


# ----------------------------------------------------------------------------
# Kernel A: level-3 path.
#   backbone stand-in 1x1 proj (Cin=3, via VPU FMAs) + BN + LeakyReLU,
#   then BackDeal3 = 1x1 conv (BN scale pre-folded) + shift + LeakyReLU.
# ----------------------------------------------------------------------------
def _level3_kernel(x_ref, wbb_ref, sbb_ref, wbd_ref, sbd_ref, o_ref):
    x = x_ref[...]                      # (tm, 3) f32
    wbb = wbb_ref[...]                  # (3, C3P) f32
    # Cin=3 projection on the VPU (3 broadcast FMAs) instead of a K=3 MXU pass
    bb = (x[:, 0:1] * wbb[0:1, :]
          + x[:, 1:2] * wbb[1:2, :]
          + x[:, 2:3] * wbb[2:3, :]
          + sbb_ref[...])
    bb = _leaky(bb)
    wbd = wbd_ref[...]                  # (C3P, OCP) bf16
    y = jnp.dot(bb.astype(wbd.dtype), wbd,
                preferred_element_type=jnp.float32) + sbd_ref[...]
    o_ref[...] = _leaky(y).astype(o_ref.dtype)


def level3_path(f3_nhwc, p):
    N, H, W, C = f3_nhwc.shape
    C3P = p['bb3_w'].shape[1]
    OCP = p['bd3_w'].shape[1]
    M = N * H * W
    tm = _choose_tm(M)
    Mp = _round_up(M, tm)
    x2d = _pad_rows(f3_nhwc.reshape(M, C), Mp)

    out2d = pl.pallas_call(
        _level3_kernel,
        out_shape=jax.ShapeDtypeStruct((Mp, OCP), jnp.float32),
        grid=(Mp // tm,),
        in_specs=[
            pl.BlockSpec((tm, C), lambda i: (i, 0)),
            pl.BlockSpec((C, C3P), lambda i: (0, 0)),
            pl.BlockSpec((1, C3P), lambda i: (0, 0)),
            pl.BlockSpec((C3P, OCP), lambda i: (0, 0)),
            pl.BlockSpec((1, OCP), lambda i: (0, 0)),
        ],
        out_specs=pl.BlockSpec((tm, OCP), lambda i: (i, 0)),
        compiler_params=pltpu.CompilerParams(
            dimension_semantics=("parallel",)),
    )(x2d, p['bb3_w'], p['bb3_shift'], p['bd3_w'], p['bd3_shift'])
    return out2d[:M].reshape(N, H, W, OCP)


# ----------------------------------------------------------------------------
# Kernel B: level-2 path + FPN add + DecoupledHead, fused.
#   backbone stand-in proj (VPU FMAs) -> BackDeal2 -> add upsampled out3
#   -> (neck identity, see TODO) -> single concatenated head matmul producing
#   one lane-dense (tm, 128) output slab (cls|box|landm zero-padded).
# ----------------------------------------------------------------------------
def _fused_fpn_head_kernel(x2_ref, x3_ref, wbb_ref, sbb_ref, wbd_ref, sbd_ref,
                           wh_ref, bh_ref, o_ref):
    x = x2_ref[...]                     # (tm, 3) f32
    wbb = wbb_ref[...]                  # (3, C2P) f32
    bb = (x[:, 0:1] * wbb[0:1, :]
          + x[:, 1:2] * wbb[1:2, :]
          + x[:, 2:3] * wbb[2:3, :]
          + sbb_ref[...])
    bb = _leaky(bb)
    wbd = wbd_ref[...]                  # (C2P, OCP) bf16
    y = jnp.dot(bb.astype(wbd.dtype), wbd,
                preferred_element_type=jnp.float32) + sbd_ref[...]
    out2 = _leaky(y)
    # out2222 = BackDeal2(out[2]) + nearest_upsample(BackDeal3(out[3]))
    xsum = out2 + x3_ref[...]
    # TODO(synk): DilatedEncoder neck source was not provided with the module;
    # it is treated as identity between the FPN sum and the decoupled head.
    wh = wh_ref[...]                    # (OCP, HOP) bf16 (concat cls|box|landm)
    head = jnp.dot(xsum.astype(wh.dtype), wh,
                   preferred_element_type=jnp.float32) + bh_ref[...]
    o_ref[...] = head.astype(o_ref.dtype)


def fused_fpn_head(f2_nhwc, out3_up_nhwc, p):
    N, H, W, C = f2_nhwc.shape
    OCP = out3_up_nhwc.shape[-1]
    C2P = p['bb2_w'].shape[1]
    HOP = p['head_w'].shape[1]
    M = N * H * W
    tm = _choose_tm(M)
    Mp = _round_up(M, tm)
    x2d = _pad_rows(f2_nhwc.reshape(M, C), Mp)
    x3d = _pad_rows(out3_up_nhwc.reshape(M, OCP), Mp)

    out2d = pl.pallas_call(
        _fused_fpn_head_kernel,
        out_shape=jax.ShapeDtypeStruct((Mp, HOP), jnp.float32),
        grid=(Mp // tm,),
        in_specs=[
            pl.BlockSpec((tm, C), lambda i: (i, 0)),
            pl.BlockSpec((tm, OCP), lambda i: (i, 0)),
            pl.BlockSpec((C, C2P), lambda i: (0, 0)),
            pl.BlockSpec((1, C2P), lambda i: (0, 0)),
            pl.BlockSpec((C2P, OCP), lambda i: (0, 0)),
            pl.BlockSpec((1, OCP), lambda i: (0, 0)),
            pl.BlockSpec((OCP, HOP), lambda i: (0, 0)),
            pl.BlockSpec((1, HOP), lambda i: (0, 0)),
        ],
        out_specs=pl.BlockSpec((tm, HOP), lambda i: (i, 0)),
        compiler_params=pltpu.CompilerParams(
            dimension_semantics=("parallel",)),
    )(x2d, x3d, p['bb2_w'], p['bb2_shift'], p['bd2_w'], p['bd2_shift'],
      p['head_w'], p['head_b'])
    return out2d[:M]


# ----------------------------------------------------------------------------
# Parameters: raw (mirrors the PyTorch module structure), then prepared
# (BN scale folded into weights, channels zero-padded to 128 multiples, head
# weights concatenated, matmul weights cast to bf16).
# ----------------------------------------------------------------------------
def _bn_fold(key, c):
    k1, k2, k3, k4 = jax.random.split(key, 4)
    gamma = 1.0 + 0.1 * jax.random.normal(k1, (1, c), jnp.float32)
    beta = 0.1 * jax.random.normal(k2, (1, c), jnp.float32)
    mean = 0.1 * jax.random.normal(k3, (1, c), jnp.float32)
    var = jnp.abs(jax.random.normal(k4, (1, c), jnp.float32)) + 0.5
    scale = gamma * jax.lax.rsqrt(var + 1e-5)
    shift = beta - mean * scale
    return scale, shift


def init_params(key, cfg):
    C_img = 3
    C2, C3 = 96, 320                 # mobilenetv2 in_channels_list[1], [2]
    OC = cfg['out_channel']
    A = cfg['num_anchor']
    ks = jax.random.split(key, 14)

    def w(k, cin, cout):
        return 0.05 * jax.random.normal(k, (cin, cout), jnp.float32)

    p = {}
    # backbone stand-in projections (see TODO in retinaface_forward)
    p['bb2_w'] = w(ks[0], C_img, C2)
    p['bb2_scale'], p['bb2_shift'] = _bn_fold(ks[1], C2)
    p['bb3_w'] = w(ks[2], C_img, C3)
    p['bb3_scale'], p['bb3_shift'] = _bn_fold(ks[3], C3)
    # BackDeal2 / BackDeal3 = conv_bn1X1(in_ch, out_channel, leaky=0.1)
    p['bd2_w'] = w(ks[4], C2, OC)
    p['bd2_scale'], p['bd2_shift'] = _bn_fold(ks[5], OC)
    p['bd3_w'] = w(ks[6], C3, OC)
    p['bd3_scale'], p['bd3_shift'] = _bn_fold(ks[7], OC)
    # DecoupledHead: cls (2A), box (4A), landm (6A), 1x1 convs with bias
    p['head_cls_w'] = w(ks[8], OC, 2 * A)
    p['head_cls_b'] = 0.02 * jax.random.normal(ks[9], (1, 2 * A), jnp.float32)
    p['head_box_w'] = w(ks[10], OC, 4 * A)
    p['head_box_b'] = 0.02 * jax.random.normal(ks[11], (1, 4 * A), jnp.float32)
    p['head_lm_w'] = w(ks[12], OC, 6 * A)
    p['head_lm_b'] = 0.02 * jax.random.normal(ks[13], (1, 6 * A), jnp.float32)
    return p


def prepare_params(raw, cfg, matmul_dtype=MATMUL_DTYPE):
    A = cfg['num_anchor']
    OC = cfg['out_channel']
    C2, C3 = 96, 320
    C2P = _round_up(C2, 128)            # 128
    C3P = _round_up(C3, 128)            # 384
    OCP = _round_up(OC, 128)            # 128
    HOP = _round_up(12 * A, 128)        # 128

    p = {}
    # backbone stand-in: fold BN scale into columns; stays f32 (VPU path)
    p['bb2_w'] = _pad2d(raw['bb2_w'] * raw['bb2_scale'], 3, C2P)
    p['bb2_shift'] = _pad2d(raw['bb2_shift'], 1, C2P)
    p['bb3_w'] = _pad2d(raw['bb3_w'] * raw['bb3_scale'], 3, C3P)
    p['bb3_shift'] = _pad2d(raw['bb3_shift'], 1, C3P)
    # BackDeal convs: fold scale, zero-pad, cast MXU operands to bf16
    p['bd2_w'] = _pad2d(raw['bd2_w'] * raw['bd2_scale'], C2P, OCP).astype(matmul_dtype)
    p['bd2_shift'] = _pad2d(raw['bd2_shift'], 1, OCP)
    p['bd3_w'] = _pad2d(raw['bd3_w'] * raw['bd3_scale'], C3P, OCP).astype(matmul_dtype)
    p['bd3_shift'] = _pad2d(raw['bd3_shift'], 1, OCP)
    # Decoupled head: concat [cls | box | landm] along output channels, pad
    w_cat = jnp.concatenate(
        [raw['head_cls_w'], raw['head_box_w'], raw['head_lm_w']], axis=1)
    b_cat = jnp.concatenate(
        [raw['head_cls_b'], raw['head_box_b'], raw['head_lm_b']], axis=1)
    p['head_w'] = _pad2d(w_cat, OCP, HOP).astype(matmul_dtype)
    p['head_b'] = _pad2d(b_cat, 1, HOP)
    return p


# ----------------------------------------------------------------------------
# Full forward (mirrors RetinaFace.forward for the 'v2' mark).
# ----------------------------------------------------------------------------
def retinaface_forward(params, inputs_nchw, cfg, mode='train'):
    A = cfg['num_anchor']
    # PyTorch conv input is NCHW -> convert once to NHWC for the kernels.
    x = jnp.transpose(inputs_nchw, (0, 2, 3, 1))

    # TODO(synk): MobileNetV2 backbone (self.body[:7]/[7:14]/[14:18]) source was
    # not provided; stand-in = strided spatial subsample + 1x1 BN-LeakyReLU
    # projection to the expected channel counts (96 @ /16, 320 @ /32).
    f2 = x[:, ::16, ::16, :]
    f3 = x[:, ::32, ::32, :]
    N, H2, W2, _ = f2.shape
    H3, W3 = f3.shape[1], f3.shape[2]

    # level-3 path: stand-in backbone + BackDeal3 (fused in one kernel)
    out3 = level3_path(f3, params)                       # (N, H3, W3, OCP)

    # F.interpolate(out3, size=[H2, W2], mode='nearest'): src = (dst*in)//out
    rows = (jnp.arange(H2) * H3) // H2
    cols = (jnp.arange(W2) * W3) // W2
    out3_up = out3[:, rows][:, :, cols]                  # (N, H2, W2, OCP)

    # level-2 path + FPN add + (identity neck) + head, fused in one kernel
    head2d = fused_fpn_head(f2, out3_up, params)         # (N*H2*W2, 128)

    # Matches PyTorch permute(0,2,3,1).view(N,-1,k): channels are already last
    # in NHWC, so contiguous reshape gives anchor-major ordering per location.
    cls_pred = head2d[:, 0:2 * A].reshape(N, H2 * W2 * A, 2)
    box_pred = head2d[:, 2 * A:6 * A].reshape(N, H2 * W2 * A, 4)
    landm_pred = head2d[:, 6 * A:12 * A].reshape(N, H2 * W2 * A, 6)

    if mode == 'train':
        return box_pred, cls_pred, landm_pred
    return box_pred, jax.nn.softmax(cls_pred, axis=-1), landm_pred


if __name__ == "__main__":
    cfg = {'name': 'mobilenetv2', 'out_channel': 48, 'in_channel': 48,
           'num_anchor': 5}
    key = jax.random.PRNGKey(0)
    k_params, k_inputs = jax.random.split(key)
    raw_params = init_params(k_params, cfg)
    params = prepare_params(raw_params, cfg)

    # NCHW image input, small but consistent with the /16 and /32 strides.
    inputs = jax.random.normal(k_inputs, (2, 3, 64, 64), jnp.float32)

    fwd = jax.jit(functools.partial(retinaface_forward, cfg=cfg, mode='train'))
    box_pred, cls_pred, landm_pred = fwd(params, inputs)
    jax.block_until_ready((box_pred, cls_pred, landm_pred))

    # N=2, feature 4x4, 5 anchors -> 80 priors
    assert box_pred.shape == (2, 80, 4), box_pred.shape
    assert cls_pred.shape == (2, 80, 2), cls_pred.shape
    assert landm_pred.shape == (2, 80, 6), landm_pred.shape
    assert box_pred.dtype == jnp.float32

    print("KERNEL_OK")
</pallas_src>

<mosaic_0001>
module attributes {stable_mosaic.version = 11 : i64} {
  func.func @_level3_kernel(%arg0: i32, %arg1: memref<16x3xf32, #tpu.memory_space<vmem>>, %arg2: memref<3x384xf32, #tpu.memory_space<vmem>>, %arg3: memref<1x384xf32, #tpu.memory_space<vmem>>, %arg4: memref<384x128xbf16, #tpu.memory_space<vmem>>, %arg5: memref<1x128xf32, #tpu.memory_space<vmem>>, %arg6: memref<16x128xf32, #tpu.memory_space<vmem>>) attributes {dimension_semantics = [#tpu.dimension_semantics<parallel>], iteration_bounds = array<i64: 1>, scalar_prefetch = 0 : i64, scratch_operands = 0 : i64, tpu.core_type = #tpu.core_type<tc>, window_params = [{transform_indices = @transform_0, window_bounds = array<i64: 16, 3>}, {pipeline_mode = #tpu.pipeline_mode<synchronous>, transform_indices = @transform_1, window_bounds = array<i64: 3, 384>}, {pipeline_mode = #tpu.pipeline_mode<synchronous>, transform_indices = @transform_2, window_bounds = array<i64: 1, 384>}, {pipeline_mode = #tpu.pipeline_mode<synchronous>, transform_indices = @transform_3, window_bounds = array<i64: 384, 128>}, {pipeline_mode = #tpu.pipeline_mode<synchronous>, transform_indices = @transform_4, window_bounds = array<i64: 1, 128>}, {transform_indices = @transform_5, window_bounds = array<i64: 16, 128>}]} {
    %c0 = arith.constant 0 : index
    %c0_0 = arith.constant 0 : index
    %0 = vector.load %arg1[%c0, %c0_0] : memref<16x3xf32, #tpu.memory_space<vmem>>, vector<16x3xf32>
    %c0_1 = arith.constant 0 : index
    %c0_2 = arith.constant 0 : index
    %1 = vector.load %arg2[%c0_1, %c0_2] : memref<3x384xf32, #tpu.memory_space<vmem>>, vector<3x384xf32>
    %2 = vector.extract_strided_slice %0 {offsets = [0, 0], sizes = [16, 1], strides = [1, 1]} : vector<16x3xf32> to vector<16x1xf32>
    %3 = vector.extract_strided_slice %1 {offsets = [0, 0], sizes = [1, 384], strides = [1, 1]} : vector<3x384xf32> to vector<1x384xf32>
    %4 = vector.broadcast %2 : vector<16x1xf32> to vector<16x384xf32>
    %5 = vector.broadcast %3 : vector<1x384xf32> to vector<16x384xf32>
    %6 = arith.mulf %4, %5 : vector<16x384xf32>
    %7 = vector.extract_strided_slice %0 {offsets = [0, 1], sizes = [16, 1], strides = [1, 1]} : vector<16x3xf32> to vector<16x1xf32>
    %8 = vector.extract_strided_slice %1 {offsets = [1, 0], sizes = [1, 384], strides = [1, 1]} : vector<3x384xf32> to vector<1x384xf32>
    %9 = vector.broadcast %7 : vector<16x1xf32> to vector<16x384xf32>
    %10 = vector.broadcast %8 : vector<1x384xf32> to vector<16x384xf32>
    %11 = arith.mulf %9, %10 : vector<16x384xf32>
    %12 = arith.addf %6, %11 : vector<16x384xf32>
    %13 = vector.extract_strided_slice %0 {offsets = [0, 2], sizes = [16, 1], strides = [1, 1]} : vector<16x3xf32> to vector<16x1xf32>
    %14 = vector.extract_strided_slice %1 {offsets = [2, 0], sizes = [1, 384], strides = [1, 1]} : vector<3x384xf32> to vector<1x384xf32>
    %15 = vector.broadcast %13 : vector<16x1xf32> to vector<16x384xf32>
    %16 = vector.broadcast %14 : vector<1x384xf32> to vector<16x384xf32>
    %17 = arith.mulf %15, %16 : vector<16x384xf32>
    %18 = arith.addf %12, %17 : vector<16x384xf32>
    %c0_3 = arith.constant 0 : index
    %c0_4 = arith.constant 0 : index
    %19 = vector.load %arg3[%c0_3, %c0_4] : memref<1x384xf32, #tpu.memory_space<vmem>>, vector<1x384xf32>
    %20 = vector.broadcast %19 : vector<1x384xf32> to vector<16x384xf32>
    %21 = arith.addf %18, %20 : vector<16x384xf32>
    %cst = arith.constant 1.000000e-01 : f32
    %22 = vector.broadcast %cst : f32 to vector<16x384xf32>
    %23 = arith.mulf %22, %21 : vector<16x384xf32>
    %24 = arith.maximumf %21, %23 : vector<16x384xf32>
    %c0_5 = arith.constant 0 : index
    %c0_6 = arith.constant 0 : index
    %25 = vector.load %arg4[%c0_5, %c0_6] : memref<384x128xbf16, #tpu.memory_space<vmem>>, vector<384x128xbf16>
    %26 = arith.truncf %24 : vector<16x384xf32> to vector<16x384xbf16>
    %cst_7 = arith.constant dense<0.000000e+00> : vector<16x128xf32>
    %27 = tpu.matmul %26, %25, %cst_7 {dimension_numbers = #tpu.dot_dimension_numbers<[1], [0], [0], [1], [0, 0, 1, 1], [], []>} : vector<16x384xbf16>, vector<384x128xbf16>, vector<16x128xf32> -> vector<16x128xf32>
    %c0_8 = arith.constant 0 : index
    %c0_9 = arith.constant 0 : index
    %28 = vector.load %arg5[%c0_8, %c0_9] : memref<1x128xf32, #tpu.memory_space<vmem>>, vector<1x128xf32>
    %29 = vector.broadcast %28 : vector<1x128xf32> to vector<16x128xf32>
    %30 = arith.addf %27, %29 : vector<16x128xf32>
    %cst_10 = arith.constant 1.000000e-01 : f32
    %31 = vector.broadcast %cst_10 : f32 to vector<16x128xf32>
    %32 = arith.mulf %31, %30 : vector<16x128xf32>
    %33 = arith.maximumf %30, %32 : vector<16x128xf32>
    %c0_11 = arith.constant 0 : index
    %c0_12 = arith.constant 0 : index
    %34 = vector.load %arg6[%c0_11, %c0_12] : memref<16x128xf32, #tpu.memory_space<vmem>>, vector<16x128xf32>
    tpu.vector_store %arg6[%c0_11, %c0_12], %33 {strides = array<i32>} : memref<16x128xf32, #tpu.memory_space<vmem>>, vector<16x128xf32>,
    return
  }
  func.func @transform_0(%arg0: i32) -> (i32, i32) {
    %c0_i32 = arith.constant 0 : i32
    %c0_i32_0 = arith.constant 0 : i32
    return %arg0, %c0_i32 : i32, i32
  }
  func.func @transform_1(%arg0: i32) -> (i32, i32) {
    %c0_i32 = arith.constant 0 : i32
    %c0_i32_0 = arith.constant 0 : i32
    %c0_i32_1 = arith.constant 0 : i32
    return %c0_i32, %c0_i32_0 : i32, i32
  }
  func.func @transform_2(%arg0: i32) -> (i32, i32) {
    %c0_i32 = arith.constant 0 : i32
    %c0_i32_0 = arith.constant 0 : i32
    %c0_i32_1 = arith.constant 0 : i32
    return %c0_i32, %c0_i32_0 : i32, i32
  }
  func.func @transform_3(%arg0: i32) -> (i32, i32) {
    %c0_i32 = arith.constant 0 : i32
    %c0_i32_0 = arith.constant 0 : i32
    %c0_i32_1 = arith.constant 0 : i32
    return %c0_i32, %c0_i32_0 : i32, i32
  }
  func.func @transform_4(%arg0: i32) -> (i32, i32) {
    %c0_i32 = arith.constant 0 : i32
    %c0_i32_0 = arith.constant 0 : i32
    %c0_i32_1 = arith.constant 0 : i32
    return %c0_i32, %c0_i32_0 : i32, i32
  }
  func.func @transform_5(%arg0: i32) -> (i32, i32) {
    %c0_i32 = arith.constant 0 : i32
    %c0_i32_0 = arith.constant 0 : i32
    return %arg0, %c0_i32 : i32, i32
  }
}

module attributes {stable_mosaic.version = 11 : i64} {
  func.func @_fused_fpn_head_kernel(%arg0: i32, %arg1: memref<16x3xf32, #tpu.memory_space<vmem>>, %arg2: memref<16x128xf32, #tpu.memory_space<vmem>>, %arg3: memref<3x128xf32, #tpu.memory_space<vmem>>, %arg4: memref<1x128xf32, #tpu.memory_space<vmem>>, %arg5: memref<128x128xbf16, #tpu.memory_space<vmem>>, %arg6: memref<1x128xf32, #tpu.memory_space<vmem>>, %arg7: memref<128x128xbf16, #tpu.memory_space<vmem>>, %arg8: memref<1x128xf32, #tpu.memory_space<vmem>>, %arg9: memref<16x128xf32, #tpu.memory_space<vmem>>) attributes {dimension_semantics = [#tpu.dimension_semantics<parallel>], iteration_bounds = array<i64: 2>, scalar_prefetch = 0 : i64, scratch_operands = 0 : i64, tpu.core_type = #tpu.core_type<tc>, window_params = [{transform_indices = @transform_0, window_bounds = array<i64: 16, 3>}, {transform_indices = @transform_1, window_bounds = array<i64: 16, 128>}, {pipeline_mode = #tpu.pipeline_mode<synchronous>, transform_indices = @transform_2, window_bounds = array<i64: 3, 128>}, {pipeline_mode = #tpu.pipeline_mode<synchronous>, transform_indices = @transform_3, window_bounds = array<i64: 1, 128>}, {pipeline_mode = #tpu.pipeline_mode<synchronous>, transform_indices = @transform_4, window_bounds = array<i64: 128, 128>}, {pipeline_mode = #tpu.pipeline_mode<synchronous>, transform_indices = @transform_5, window_bounds = array<i64: 1, 128>}, {pipeline_mode = #tpu.pipeline_mode<synchronous>, transform_indices = @transform_6, window_bounds = array<i64: 128, 128>}, {pipeline_mode = #tpu.pipeline_mode<synchronous>, transform_indices = @transform_7, window_bounds = array<i64: 1, 128>}, {transform_indices = @transform_8, window_bounds = array<i64: 16, 128>}]} {
    %c0 = arith.constant 0 : index
    %c0_0 = arith.constant 0 : index
    %0 = vector.load %arg1[%c0, %c0_0] : memref<16x3xf32, #tpu.memory_space<vmem>>, vector<16x3xf32>
    %c0_1 = arith.constant 0 : index
    %c0_2 = arith.constant 0 : index
    %1 = vector.load %arg3[%c0_1, %c0_2] : memref<3x128xf32, #tpu.memory_space<vmem>>, vector<3x128xf32>
    %2 = vector.extract_strided_slice %0 {offsets = [0, 0], sizes = [16, 1], strides = [1, 1]} : vector<16x3xf32> to vector<16x1xf32>
    %3 = vector.extract_strided_slice %1 {offsets = [0, 0], sizes = [1, 128], strides = [1, 1]} : vector<3x128xf32> to vector<1x128xf32>
    %4 = vector.broadcast %2 : vector<16x1xf32> to vector<16x128xf32>
    %5 = vector.broadcast %3 : vector<1x128xf32> to vector<16x128xf32>
    %6 = arith.mulf %4, %5 : vector<16x128xf32>
    %7 = vector.extract_strided_slice %0 {offsets = [0, 1], sizes = [16, 1], strides = [1, 1]} : vector<16x3xf32> to vector<16x1xf32>
    %8 = vector.extract_strided_slice %1 {offsets = [1, 0], sizes = [1, 128], strides = [1, 1]} : vector<3x128xf32> to vector<1x128xf32>
    %9 = vector.broadcast %7 : vector<16x1xf32> to vector<16x128xf32>
    %10 = vector.broadcast %8 : vector<1x128xf32> to vector<16x128xf32>
    %11 = arith.mulf %9, %10 : vector<16x128xf32>
    %12 = arith.addf %6, %11 : vector<16x128xf32>
    %13 = vector.extract_strided_slice %0 {offsets = [0, 2], sizes = [16, 1], strides = [1, 1]} : vector<16x3xf32> to vector<16x1xf32>
    %14 = vector.extract_strided_slice %1 {offsets = [2, 0], sizes = [1, 128], strides = [1, 1]} : vector<3x128xf32> to vector<1x128xf32>
    %15 = vector.broadcast %13 : vector<16x1xf32> to vector<16x128xf32>
    %16 = vector.broadcast %14 : vector<1x128xf32> to vector<16x128xf32>
    %17 = arith.mulf %15, %16 : vector<16x128xf32>
    %18 = arith.addf %12, %17 : vector<16x128xf32>
    %c0_3 = arith.constant 0 : index
    %c0_4 = arith.constant 0 : index
    %19 = vector.load %arg4[%c0_3, %c0_4] : memref<1x128xf32, #tpu.memory_space<vmem>>, vector<1x128xf32>
    %20 = vector.broadcast %19 : vector<1x128xf32> to vector<16x128xf32>
    %21 = arith.addf %18, %20 : vector<16x128xf32>
    %cst = arith.constant 1.000000e-01 : f32
    %22 = vector.broadcast %cst : f32 to vector<16x128xf32>
    %23 = arith.mulf %22, %21 : vector<16x128xf32>
    %24 = arith.maximumf %21, %23 : vector<16x128xf32>
    %c0_5 = arith.constant 0 : index
    %c0_6 = arith.constant 0 : index
    %25 = vector.load %arg5[%c0_5, %c0_6] : memref<128x128xbf16, #tpu.memory_space<vmem>>, vector<128x128xbf16>
    %26 = arith.truncf %24 : vector<16x128xf32> to vector<16x128xbf16>
    %cst_7 = arith.constant dense<0.000000e+00> : vector<16x128xf32>
    %27 = tpu.matmul %26, %25, %cst_7 {dimension_numbers = #tpu.dot_dimension_numbers<[1], [0], [0], [1], [0, 0, 1, 1], [], []>} : vector<16x128xbf16>, vector<128x128xbf16>, vector<16x128xf32> -> vector<16x128xf32>
    %c0_8 = arith.constant 0 : index
    %c0_9 = arith.constant 0 : index
    %28 = vector.load %arg6[%c0_8, %c0_9] : memref<1x128xf32, #tpu.memory_space<vmem>>, vector<1x128xf32>
    %29 = vector.broadcast %28 : vector<1x128xf32> to vector<16x128xf32>
    %30 = arith.addf %27, %29 : vector<16x128xf32>
    %cst_10 = arith.constant 1.000000e-01 : f32
    %31 = vector.broadcast %cst_10 : f32 to vector<16x128xf32>
    %32 = arith.mulf %31, %30 : vector<16x128xf32>
    %33 = arith.maximumf %30, %32 : vector<16x128xf32>
    %c0_11 = arith.constant 0 : index
    %c0_12 = arith.constant 0 : index
    %34 = vector.load %arg2[%c0_11, %c0_12] : memref<16x128xf32, #tpu.memory_space<vmem>>, vector<16x128xf32>
    %35 = arith.addf %33, %34 : vector<16x128xf32>
    %c0_13 = arith.constant 0 : index
    %c0_14 = arith.constant 0 : index
    %36 = vector.load %arg7[%c0_13, %c0_14] : memref<128x128xbf16, #tpu.memory_space<vmem>>, vector<128x128xbf16>
    %37 = arith.truncf %35 : vector<16x128xf32> to vector<16x128xbf16>
    %cst_15 = arith.constant dense<0.000000e+00> : vector<16x128xf32>
    %38 = tpu.matmul %37, %36, %cst_15 {dimension_numbers = #tpu.dot_dimension_numbers<[1], [0], [0], [1], [0, 0, 1, 1], [], []>} : vector<16x128xbf16>, vector<128x128xbf16>, vector<16x128xf32> -> vector<16x128xf32>
    %c0_16 = arith.constant 0 : index
    %c0_17 = arith.constant 0 : index
    %39 = vector.load %arg8[%c0_16, %c0_17] : memref<1x128xf32, #tpu.memory_space<vmem>>, vector<1x128xf32>
    %40 = vector.broadcast %39 : vector<1x128xf32> to vector<16x128xf32>
    %41 = arith.addf %38, %40 : vector<16x128xf32>
    %c0_18 = arith.constant 0 : index
    %c0_19 = arith.constant 0 : index
    %42 = vector.load %arg9[%c0_18, %c0_19] : memref<16x128xf32, #tpu.memory_space<vmem>>, vector<16x128xf32>
    tpu.vector_store %arg9[%c0_18, %c0_19], %41 {strides = array<i32>} : memref<16x128xf32, #tpu.memory_space<vmem>>, vector<16x128xf32>,
    return
  }
  func.func @transform_0(%arg0: i32) -> (i32, i32) {
    %c0_i32 = arith.constant 0 : i32
    %c0_i32_0 = arith.constant 0 : i32
    return %arg0, %c0_i32 : i32, i32
  }
  func.func @transform_1(%arg0: i32) -> (i32, i32) {
    %c0_i32 = arith.constant 0 : i32
    %c0_i32_0 = arith.constant 0 : i32
    return %arg0, %c0_i32 : i32, i32
  }
  func.func @transform_2(%arg0: i32) -> (i32, i32) {
    %c0_i32 = arith.constant 0 : i32
    %c0_i32_0 = arith.constant 0 : i32
    %c0_i32_1 = arith.constant 0 : i32
    return %c0_i32, %c0_i32_0 : i32, i32
  }
  func.func @transform_3(%arg0: i32) -> (i32, i32) {
    %c0_i32 = arith.constant 0 : i32
    %c0_i32_0 = arith.constant 0 : i32
    %c0_i32_1 = arith.constant 0 : i32
    return %c0_i32, %c0_i32_0 : i32, i32
  }
  func.func @transform_4(%arg0: i32) -> (i32, i32) {
    %c0_i32 = arith.constant 0 : i32
    %c0_i32_0 = arith.constant 0 : i32
    %c0_i32_1 = arith.constant 0 : i32
    return %c0_i32, %c0_i32_0 : i32, i32
  }
  func.func @transform_5(%arg0: i32) -> (i32, i32) {
    %c0_i32 = arith.constant 0 : i32
    %c0_i32_0 = arith.constant 0 : i32
    %c0_i32_1 = arith.constant 0 : i32
    return %c0_i32, %c0_i32_0 : i32, i32
  }
  func.func @transform_6(%arg0: i32) -> (i32, i32) {
    %c0_i32 = arith.constant 0 : i32
    %c0_i32_0 = arith.constant 0 : i32
    %c0_i32_1 = arith.constant 0 : i32
    return %c0_i32, %c0_i32_0 : i32, i32
  }
  func.func @transform_7(%arg0: i32) -> (i32, i32) {
    %c0_i32 = arith.constant 0 : i32
    %c0_i32_0 = arith.constant 0 : i32
    %c0_i32_1 = arith.constant 0 : i32
    return %c0_i32, %c0_i32_0 : i32, i32
  }
  func.func @transform_8(%arg0: i32) -> (i32, i32) {
    %c0_i32 = arith.constant 0 : i32
    %c0_i32_0 = arith.constant 0 : i32
    return %arg0, %c0_i32 : i32, i32
  }
}

</mosaic_0001>

<llo_original>
// kernel: retinaface_forward.2
$region0: #{retinaface_forward.2}
  #allocation0 [shape = 'u32[]', space=smem, size = 0x4, offset = 0x4, fixed_abs, tag = 'smem constant byte address 0x4 - core index']
  #allocation1 [shape = 'u32[144,128]{1,0:T(1,128)}', space=vmem, size = 0x12000, scoped, tag = 'internal scratch']
  %s0 = inlined_call_operand.vmem [shape: f32[16,3], index: 0, kind: input, shape index: {}]
  %s1 = inlined_call_operand.vmem [shape: f32[3,384], index: 1, kind: input, shape index: {}]
  %s2 = inlined_call_operand.vmem [shape: f32[1,384], index: 2, kind: input, shape index: {}]
  %s3 = inlined_call_operand.vmem [shape: bf16[384,128], index: 3, kind: input, shape index: {}]
  %s4 = inlined_call_operand.vmem [shape: f32[1,128], index: 4, kind: input, shape index: {}]
  %s5 = inlined_call_operand.vmem [shape: f32[16,128], index: 5, kind: output, shape index: {}]
  %s6 = sld [smem:[#allocation0]]
  $region30: #{retinaface_forward.2} parent=0
    _
  %s8 = ssub.s32 1, %s6
  %s9 = scalar_select 0, %s8, %s6
  // Predicated region
  $region2: #{retinaface_forward.2} parent=0 // pred_check
    _
  $region3: #{retinaface_forward.2} parent=0 // pred_check_branch
    %11 = sbr.rel (0) target = $region5
  $region4: #{retinaface_forward.2} parent=0 // pred_region
    _
  $region5: #{retinaface_forward.2} parent=0 // pred_fallthru
    _
  // Predicated region
  $region6: #{retinaface_forward.2} parent=0 // pred_check
    _
  $region7: #{retinaface_forward.2} parent=0 // pred_check_branch
    %13 = sbr.rel (0) target = $region9
  $region8: #{retinaface_forward.2} parent=0 // pred_region
    _
  $region9: #{retinaface_forward.2} parent=0 // pred_fallthru
    _
  // Predicated region
  $region10: #{retinaface_forward.2} parent=0 // pred_check
    _
  $region11: #{retinaface_forward.2} parent=0 // pred_check_branch
    %15 = sbr.rel (0) target = $region13
  $region12: #{retinaface_forward.2} parent=0 // pred_region
    _
  $region13: #{retinaface_forward.2} parent=0 // pred_fallthru
    _
  // Predicated region
  $region14: #{retinaface_forward.2} parent=0 // pred_check
    _
  $region15: #{retinaface_forward.2} parent=0 // pred_check_branch
    %17 = sbr.rel (0) target = $region17
  $region16: #{retinaface_forward.2} parent=0 // pred_region
    _
  $region17: #{retinaface_forward.2} parent=0 // pred_fallthru
    _
  // Predicated region
  $region18: #{retinaface_forward.2} parent=0 // pred_check
    _
  $region19: #{retinaface_forward.2} parent=0 // pred_check_branch
    %19 = sbr.rel (0) target = $region21
  $region20: #{retinaface_forward.2} parent=0 // pred_region
    _
  $region21: #{retinaface_forward.2} parent=0 // pred_fallthru
    _
  %v21 = vld [vmem:[%s0] sm:$0xff]
  %v22 = vld [vmem:[%s0 + $0x8] sm:$0xff]
  %v23 = vld [vmem:[%s1] sm:$0x77]
  %v24 = vld [vmem:[%s1 + $0x8] sm:$0x7]
  %26 = vset.pattern.permute.xlu0 0
  %27 = vperm.xlu0 %26, %v21
  %v28 = vpop.permute.xlu0 %27
  %31 = vset.pattern.permute.xlu0 0
  %32 = vperm.xlu0 %31, %v22
  %v33 = vpop.permute.xlu0 %32
  %v37 = vlaneseq
  %v38 = vshrl.u32 %v37, 7
  %v39 = vsub.s32 0, %v38
  %v40 = vrot.slane %v23, %v39
  %v41 = vlaneseq
  %v42 = vshrl.u32 %v41, 7
  %v43 = vsub.s32 4, %v42
  %v44 = vrot.slane %v23, %v43
  %v45 = vlaneseq
  %v46 = vshrl.u32 %v45, 7
  %v47 = vsub.s32 0, %v46
  %v48 = vrot.slane %v24, %v47
  %v52 = vlaneseq
  %v53 = vshrl.u32 %v52, 7
  %v54 = vsub.s32 0, %v53
  %v55 = vrot.slane %v40, %v54
  %v56 = vlaneseq
  %v57 = vshrl.u32 %v56, 7
  %v58 = vsub.s32 0, %v57
  %v59 = vrot.slane %v44, %v58
  %v60 = vlaneseq
  %v61 = vshrl.u32 %v60, 7
  %v62 = vsub.s32 0, %v61
  %v63 = vrot.slane %v48, %v62
  %v64 = vmul.f32 %v28, %v55
  %v65 = vmul.f32 %v28, %v59
  %v66 = vmul.f32 %v28, %v63
  %v67 = vmul.f32 %v33, %v55
  %v68 = vmul.f32 %v33, %v59
  %v69 = vmul.f32 %v33, %v63
  %70 = vset.pattern.permute.xlu0 1
  %71 = vperm.xlu0 %70, %v21
  %v72 = vpop.permute.xlu0 %71
  %74 = vset.pattern.permute.xlu0 1
  %75 = vperm.xlu0 %74, %v22
  %v76 = vpop.permute.xlu0 %75
  %v78 = vlaneseq
  %v79 = vshrl.u32 %v78, 7
  %v80 = vsub.s32 1, %v79
  %v81 = vrot.slane %v23, %v80
  %v82 = vlaneseq
  %v83 = vshrl.u32 %v82, 7
  %v84 = vsub.s32 5, %v83
  %v85 = vrot.slane %v23, %v84
  %v86 = vlaneseq
  %v87 = vshrl.u32 %v86, 7
  %v88 = vsub.s32 1, %v87
  %v89 = vrot.slane %v24, %v88
  %v93 = vlaneseq
  %v94 = vshrl.u32 %v93, 7
  %v95 = vsub.s32 1, %v94
  %v96 = vrot.slane %v81, %v95
  %v97 = vlaneseq
  %v98 = vshrl.u32 %v97, 7
  %v99 = vsub.s32 1, %v98
  %v100 = vrot.slane %v85, %v99
  %v101 = vlaneseq
  %v102 = vshrl.u32 %v101, 7
  %v103 = vsub.s32 1, %v102
  %v104 = vrot.slane %v89, %v103
  %v105 = vmul.f32 %v72, %v96
  %v106 = vmul.f32 %v72, %v100
  %v107 = vmul.f32 %v72, %v104
  %v108 = vmul.f32 %v76, %v96
  %v109 = vmul.f32 %v76, %v100
  %v110 = vmul.f32 %v76, %v104
  %v111 = vadd.f32 %v64, %v105
  %v112 = vadd.f32 %v65, %v106
  %v113 = vadd.f32 %v66, %v107
  %v114 = vadd.f32 %v67, %v108
  %v115 = vadd.f32 %v68, %v109
  %v116 = vadd.f32 %v69, %v110
  %117 = vset.pattern.permute.xlu0 2
  %118 = vperm.xlu0 %117, %v21
  %v119 = vpop.permute.xlu0 %118
  %121 = vset.pattern.permute.xlu0 2
  %122 = vperm.xlu0 %121, %v22
  %v123 = vpop.permute.xlu0 %122
  %v125 = vlaneseq
  %v126 = vshrl.u32 %v125, 7
  %v127 = vsub.s32 2, %v126
  %v128 = vrot.slane %v23, %v127
  %v129 = vlaneseq
  %v130 = vshrl.u32 %v129, 7
  %v131 = vsub.s32 6, %v130
  %v132 = vrot.slane %v23, %v131
  %v133 = vlaneseq
  %v134 = vshrl.u32 %v133, 7
  %v135 = vsub.s32 2, %v134
  %v136 = vrot.slane %v24, %v135
  %v140 = vlaneseq
  %v141 = vshrl.u32 %v140, 7
  %v142 = vsub.s32 2, %v141
  %v143 = vrot.slane %v128, %v142
  %v144 = vlaneseq
  %v145 = vshrl.u32 %v144, 7
  %v146 = vsub.s32 2, %v145
  %v147 = vrot.slane %v132, %v146
  %v148 = vlaneseq
  %v149 = vshrl.u32 %v148, 7
  %v150 = vsub.s32 2, %v149
  %v151 = vrot.slane %v136, %v150
  %v152 = vmul.f32 %v119, %v143
  %v153 = vmul.f32 %v119, %v147
  %v154 = vmul.f32 %v119, %v151
  %v155 = vmul.f32 %v123, %v143
  %v156 = vmul.f32 %v123, %v147
  %v157 = vmul.f32 %v123, %v151
  %v158 = vadd.f32 %v111, %v152
  %v159 = vadd.f32 %v112, %v153
  %v160 = vadd.f32 %v113, %v154
  %v161 = vadd.f32 %v114, %v155
  %v162 = vadd.f32 %v115, %v156
  %v163 = vadd.f32 %v116, %v157
  %v164 = vld [vmem:[%s2] sm:$0x7]
  %v166 = vlaneseq
  %v167 = vshrl.u32 %v166, 7
  %v168 = vsub.s32 0, %v167
  %v169 = vrot.slane %v164, %v168
  %v170 = vlaneseq
  %v171 = vshrl.u32 %v170, 7
  %v172 = vsub.s32 1, %v171
  %v173 = vrot.slane %v164, %v172
  %v174 = vlaneseq
  %v175 = vshrl.u32 %v174, 7
  %v176 = vsub.s32 2, %v175
  %v177 = vrot.slane %v164, %v176
  %v181 = vadd.f32 %v158, %v169
  %v182 = vadd.f32 %v159, %v173
  %v183 = vadd.f32 %v160, %v177
  %v184 = vadd.f32 %v161, %v169
  %v185 = vadd.f32 %v162, %v173
  %v186 = vadd.f32 %v163, %v177
  %v187 = vmul.f32 %v181, 0.1
  %v188 = vmul.f32 %v182, 0.1
  %v189 = vmul.f32 %v183, 0.1
  %v190 = vmul.f32 %v184, 0.1
  %v191 = vmul.f32 %v185, 0.1
  %v192 = vmul.f32 %v186, 0.1
  %v193 = vmax.f32 %v181, %v187
  %v194 = vmax.f32 %v182, %v188
  %v195 = vmax.f32 %v183, %v189
  %v196 = vmax.f32 %v184, %v190
  %v197 = vmax.f32 %v185, %v191
  %v198 = vmax.f32 %v186, %v192
  %v199 = vld [vmem:[%s3] sm:$0xf]
  %v200 = vld [vmem:[%s3 + $0x4] sm:$0xf]
  %v201 = vld [vmem:[%s3 + $0x8] sm:$0xf]
  %v202 = vld [vmem:[%s3 + $0xc] sm:$0xf]
  %v203 = vld [vmem:[%s3 + $0x10] sm:$0xf]
  %v204 = vld [vmem:[%s3 + $0x14] sm:$0xf]
  %v205 = vld [vmem:[%s3 + $0x18] sm:$0xf]
  %v206 = vld [vmem:[%s3 + $0x1c] sm:$0xf]
  %v207 = vld [vmem:[%s3 + $0x20] sm:$0xf]
  %v208 = vld [vmem:[%s3 + $0x24] sm:$0xf]
  %v209 = vld [vmem:[%s3 + $0x28] sm:$0xf]
  %v210 = vld [vmem:[%s3 + $0x2c] sm:$0xf]
  %v211 = vld [vmem:[%s3 + $0x30] sm:$0xf]
  %v212 = vld [vmem:[%s3 + $0x34] sm:$0xf]
  %v213 = vld [vmem:[%s3 + $0x38] sm:$0xf]
  %v214 = vld [vmem:[%s3 + $0x3c] sm:$0xf]
  %v215 = vld [vmem:[%s3 + $0x40] sm:$0xf]
  %v216 = vld [vmem:[%s3 + $0x44] sm:$0xf]
  %v217 = vld [vmem:[%s3 + $0x48] sm:$0xf]
  %v218 = vld [vmem:[%s3 + $0x4c] sm:$0xf]
  %v219 = vld [vmem:[%s3 + $0x50] sm:$0xf]
  %v220 = vld [vmem:[%s3 + $0x54] sm:$0xf]
  %v221 = vld [vmem:[%s3 + $0x58] sm:$0xf]
  %v222 = vld [vmem:[%s3 + $0x5c] sm:$0xf]
  %v223 = vld [vmem:[%s3 + $0x60] sm:$0xf]
  %v224 = vld [vmem:[%s3 + $0x64] sm:$0xf]
  %v225 = vld [vmem:[%s3 + $0x68] sm:$0xf]
  %v226 = vld [vmem:[%s3 + $0x6c] sm:$0xf]
  %v227 = vld [vmem:[%s3 + $0x70] sm:$0xf]
  %v228 = vld [vmem:[%s3 + $0x74] sm:$0xf]
  %v229 = vld [vmem:[%s3 + $0x78] sm:$0xf]
  %v230 = vld [vmem:[%s3 + $0x7c] sm:$0xf]
  %v231 = vld [vmem:[%s3 + $0x80] sm:$0xf]
  %v232 = vld [vmem:[%s3 + $0x84] sm:$0xf]
  %v233 = vld [vmem:[%s3 + $0x88] sm:$0xf]
  %v234 = vld [vmem:[%s3 + $0x8c] sm:$0xf]
  %v235 = vld [vmem:[%s3 + $0x90] sm:$0xf]
  %v236 = vld [vmem:[%s3 + $0x94] sm:$0xf]
  %v237 = vld [vmem:[%s3 + $0x98] sm:$0xf]
  %v238 = vld [vmem:[%s3 + $0x9c] sm:$0xf]
  %v239 = vld [vmem:[%s3 + $0xa0] sm:$0xf]
  %v240 = vld [vmem:[%s3 + $0xa4] sm:$0xf]
  %v241 = vld [vmem:[%s3 + $0xa8] sm:$0xf]
  %v242 = vld [vmem:[%s3 + $0xac] sm:$0xf]
  %v243 = vld [vmem:[%s3 + $0xb0] sm:$0xf]
  %v244 = vld [vmem:[%s3 + $0xb4] sm:$0xf]
  %v245 = vld [vmem:[%s3 + $0xb8] sm:$0xf]
  %v246 = vld [vmem:[%s3 + $0xbc] sm:$0xf]
  %v247 = vpack.c.bf16 %v196, %v193
  %v248 = vpack.c.bf16 %v197, %v194
  %v249 = vpack.c.bf16 %v198, %v195
  %v250 = vld [vmem:[%s4] sm:$0x1]
  %v252 = vlaneseq
  %v253 = vshrl.u32 %v252, 7
  %v254 = vsub.s32 0, %v253
  %v255 = vrot.slane %v250, %v254
  %v305 = vunpack.c.l.b16 %v199
  %v306 = vunpack.c.l.b16 %v200
  %v307 = vunpack.c.l.b16 %v201
  %v308 = vunpack.c.l.b16 %v202
  %v309 = vunpack.c.l.b16 %v203
  %v310 = vunpack.c.l.b16 %v204
  %v311 = vunpack.c.l.b16 %v205
  %v312 = vunpack.c.l.b16 %v206
  %v313 = vunpack.c.l.b16 %v207
  %v314 = vunpack.c.l.b16 %v208
  %v315 = vunpack.c.l.b16 %v209
  %v316 = vunpack.c.l.b16 %v210
  %v317 = vunpack.c.l.b16 %v211
  %v318 = vunpack.c.l.b16 %v212
  %v319 = vunpack.c.l.b16 %v213
  %v320 = vunpack.c.l.b16 %v214
  %v321 = vunpack.c.l.b16 %v215
  %v322 = vunpack.c.l.b16 %v216
  %v323 = vunpack.c.l.b16 %v217
  %v324 = vunpack.c.l.b16 %v218
  %v325 = vunpack.c.l.b16 %v219
  %v326 = vunpack.c.l.b16 %v220
  %v327 = vunpack.c.l.b16 %v221
  %v328 = vunpack.c.l.b16 %v222
  %v329 = vunpack.c.l.b16 %v223
  %v330 = vunpack.c.l.b16 %v224
  %v331 = vunpack.c.l.b16 %v225
  %v332 = vunpack.c.l.b16 %v226
  %v333 = vunpack.c.l.b16 %v227
  %v334 = vunpack.c.l.b16 %v228
  %v335 = vunpack.c.l.b16 %v229
  %v336 = vunpack.c.l.b16 %v230
  %v337 = vunpack.c.l.b16 %v231
  %v338 = vunpack.c.l.b16 %v232
  %v339 = vunpack.c.l.b16 %v233
  %v340 = vunpack.c.l.b16 %v234
  %v341 = vunpack.c.l.b16 %v235
  %v342 = vunpack.c.l.b16 %v236
  %v343 = vunpack.c.l.b16 %v237
  %v344 = vunpack.c.l.b16 %v238
  %v345 = vunpack.c.l.b16 %v239
  %v346 = vunpack.c.l.b16 %v240
  %v347 = vunpack.c.l.b16 %v241
  %v348 = vunpack.c.l.b16 %v242
  %v349 = vunpack.c.l.b16 %v243
  %v350 = vunpack.c.l.b16 %v244
  %v351 = vunpack.c.l.b16 %v245
  %v352 = vunpack.c.l.b16 %v246
  %v353 = vpack.c.b16 %v306, %v305
  %v354 = vpack.c.b16 %v308, %v307
  %v355 = vpack.c.b16 %v310, %v309
  %v356 = vpack.c.b16 %v312, %v311
  %v357 = vpack.c.b16 %v314, %v313
  %v358 = vpack.c.b16 %v316, %v315
  %v359 = vpack.c.b16 %v318, %v317
  %v360 = vpack.c.b16 %v320, %v319
  %v361 = vpack.c.b16 %v322, %v321
  %v362 = vpack.c.b16 %v324, %v323
  %v363 = vpack.c.b16 %v326, %v325
  %v364 = vpack.c.b16 %v328, %v327
  %v365 = vpack.c.b16 %v330, %v329
  %v366 = vpack.c.b16 %v332, %v331
  %v367 = vpack.c.b16 %v334, %v333
  %v368 = vpack.c.b16 %v336, %v335
  %v369 = vpack.c.b16 %v338, %v337
  %v370 = vpack.c.b16 %v340, %v339
  %v371 = vpack.c.b16 %v342, %v341
  %v372 = vpack.c.b16 %v344, %v343
  %v373 = vpack.c.b16 %v346, %v345
  %v374 = vpack.c.b16 %v348, %v347
  %v375 = vpack.c.b16 %v350, %v349
  %v376 = vpack.c.b16 %v352, %v351
  %401 = vmatprep.subr.bf16.mxu0 0
  %402 = vmatpush1.bf16.msra.mxu0 %v353
  %403 = vmatprep.subr.bf16.mxu0 0
  %404 = vmatpush1.bf16.msra.mxu0 %v354
  %405 = vmatprep.subr.bf16.mxu0 0
  %406 = vmatpush1.bf16.msra.mxu0 %v355
  %407 = vmatprep.subr.bf16.mxu0 0
  %408 = vmatpush1.bf16.msra.mxu0 %v356
  %409 = vmatprep.subr.bf16.mxu0 0
  %410 = vmatpush1.bf16.msra.mxu0 %v357
  %411 = vmatprep.subr.bf16.mxu0 0
  %412 = vmatpush1.bf16.msra.mxu0 %v358
  %413 = vmatprep.subr.bf16.mxu0 0
  %414 = vmatpush1.bf16.msra.mxu0 %v359
  %415 = vmatprep.subr.bf16.mxu0 0
  %416 = vmatpush1.bf16.msra.mxu0 %v360
  %417 = vmatprep.subr.bf16.mxu0 0
  %418 = vmatpush1.bf16.msra.mxu0 %v361
  %419 = vmatprep.subr.bf16.mxu0 0
  %420 = vmatpush1.bf16.msra.mxu0 %v362
  %421 = vmatprep.subr.bf16.mxu0 0
  %422 = vmatpush1.bf16.msra.mxu0 %v363
  %423 = vmatprep.subr.bf16.mxu0 0
  %424 = vmatpush1.bf16.msra.mxu0 %v364
  %425 = vmatprep.subr.bf16.mxu0 0
  %426 = vmatpush1.bf16.msra.mxu0 %v365
  %427 = vmatprep.subr.bf16.mxu0 0
  %428 = vmatpush1.bf16.msra.mxu0 %v366
  %429 = vmatprep.subr.bf16.mxu0 0
  %430 = vmatpush1.bf16.msra.mxu0 %v367
  %431 = vmatprep.subr.bf16.mxu0 0
  %432 = vmatpush1.bf16.msra.mxu0 %v368
  %433 = vmatprep.mubr.bf16.mxu0 %v248
  %434 = vmatmul.mubr.bf16.gmra.mrb[0].mxu0 %v247
  %v435 = vpop.f32.mrb[0].mxu0
  %v436 = vadd.f32 %v255, %v435
  %v437 = vpop.f32.mrb[0].mxu0
  %v438 = vpop.f32.mrb[0].mxu0
  %v439 = vadd.f32 %v255, %v438
  %v440 = vpop.f32.mrb[0].mxu0
  %441 = vdwg.mxu0
  %442 = vmatprep.subr.bf16.mxu0 0
  %443 = vmatpush1.bf16.msra.mxu0 %v369
  %444 = vmatprep.subr.bf16.mxu0 0
  %445 = vmatpush1.bf16.msra.mxu0 %v370
  %446 = vmatprep.subr.bf16.mxu0 0
  %447 = vmatpush1.bf16.msra.mxu0 %v371
  %448 = vmatprep.subr.bf16.mxu0 0
  %449 = vmatpush1.bf16.msra.mxu0 %v372
  %450 = vmatprep.subr.bf16.mxu0 0
  %451 = vmatpush1.bf16.msra.mxu0 %v373
  %452 = vmatprep.subr.bf16.mxu0 0
  %453 = vmatpush1.bf16.msra.mxu0 %v374
  %454 = vmatprep.subr.bf16.mxu0 0
  %455 = vmatpush1.bf16.msra.mxu0 %v375
  %456 = vmatprep.subr.bf16.mxu0 0
  %457 = vmatpush1.bf16.msra.mxu0 %v376
  %458 = vmatprep.subr.bf16.mxu0 0
  %459 = vmatpush1.bf16.msra.mxu0 0
  %460 = vmatprep.subr.bf16.mxu0 0
  %461 = vmatpush1.bf16.msra.mxu0 0
  %462 = vmatprep.subr.bf16.mxu0 0
  %463 = vmatpush1.bf16.msra.mxu0 0
  %464 = vmatprep.subr.bf16.mxu0 0
  %465 = vmatpush1.bf16.msra.mxu0 0
  %466 = vmatprep.subr.bf16.mxu0 0
  %467 = vmatpush1.bf16.msra.mxu0 0
  %468 = vmatprep.subr.bf16.mxu0 0
  %469 = vmatpush1.bf16.msra.mxu0 0
  %470 = vmatprep.subr.bf16.mxu0 0
  %471 = vmatpush1.bf16.msra.mxu0 0
  %472 = vmatprep.subr.bf16.mxu0 0
  %473 = vmatpush1.bf16.msra.mxu0 0
  %474 = vmatprep.mubr.bf16.mxu0 0
  %475 = vmatmul.mubr.bf16.gmra.mrb[0].mxu0 %v249
  %v476 = vpop.f32.mrb[0].mxu0
  %v477 = vadd.f32 %v436, %v476
  %v478 = vpop.f32.mrb[0].mxu0
  %v479 = vpop.f32.mrb[0].mxu0
  %v480 = vadd.f32 %v439, %v479
  %v481 = vpop.f32.mrb[0].mxu0
  %482 = vdwg.mxu0
  %v483 = vmul.f32 %v477, 0.1
  %v484 = vmul.f32 %v480, 0.1
  %v485 = vmax.f32 %v477, %v483
  %v486 = vmax.f32 %v480, %v484
  %487 = vst [vmem:[%s5] sm:$0xff] %v485
  %488 = vst [vmem:[%s5 + $0x8] sm:$0xff] %v486
  // Predicated region
  $region22: #{retinaface_forward.2} parent=0 // pred_check
    _
  $region23: #{retinaface_forward.2} parent=0 // pred_check_branch
    %490 = sbr.rel (0) target = $region25
  $region24: #{retinaface_forward.2} parent=0 // pred_region
    _
  $region25: #{retinaface_forward.2} parent=0 // pred_fallthru
    _
  // Predicated region
  $region26: #{retinaface_forward.2} parent=0 // pred_check
    _
  $region27: #{retinaface_forward.2} parent=0 // pred_check_branch
    %492 = sbr.rel (0) target = $region29
  $region28: #{retinaface_forward.2} parent=0 // pred_region
    _
  $region29: #{retinaface_forward.2} parent=0 // pred_fallthru
    _

// kernel: retinaface_forward.3
$region0: #{retinaface_forward.3}
  #allocation0 [shape = 'u32[]', space=smem, size = 0x4, offset = 0x4, fixed_abs, tag = 'smem constant byte address 0x4 - core index']
  #allocation1 [shape = 'u32[144,128]{1,0:T(1,128)}', space=vmem, size = 0x12000, scoped, tag = 'internal scratch']
  %s0 = inlined_call_operand.vmem [shape: f32[32,3], index: 0, kind: input, shape index: {}]
  %s1 = inlined_call_operand.vmem [shape: f32[32,128], index: 1, kind: input, shape index: {}]
  %s2 = inlined_call_operand.vmem [shape: f32[3,128], index: 2, kind: input, shape index: {}]
  %s3 = inlined_call_operand.vmem [shape: f32[1,128], index: 3, kind: input, shape index: {}]
  %s4 = inlined_call_operand.vmem [shape: bf16[128,128], index: 4, kind: input, shape index: {}]
  %s5 = inlined_call_operand.vmem [shape: f32[1,128], index: 5, kind: input, shape index: {}]
  %s6 = inlined_call_operand.vmem [shape: bf16[128,128], index: 6, kind: input, shape index: {}]
  %s7 = inlined_call_operand.vmem [shape: f32[1,128], index: 7, kind: input, shape index: {}]
  %s8 = inlined_call_operand.vmem [shape: f32[32,128], index: 8, kind: output, shape index: {}]
  %s9 = sld [smem:[#allocation0]]
  $region65: #{retinaface_forward.3} parent=0
    _
  %s11 = ssub.s32 1, %s9
  %s12 = scalar_select 0, %s11, %s9
  loop: start=0, step=1, limit=4
  $region2: #{retinaface_forward.3} parent=0 // loop_pre_header
    _
  $region3: #{retinaface_forward.3} parent=0 // loop_header
    %s14 = sphi 0, %s18
    %p15 = scmp.ge.s32.totalorder %s14, 4
    %s24 = sphi 0, %s26
    %s27 = sphi 0, %s24
    %s28 = sphi 0, %s27
    %s44 = sphi 0, %s28
    %s50 = sphi 0, %s52
    %s53 = sphi 0, %s50
    %s54 = sphi 0, %s53
    %s70 = sphi 0, %s54
    %s74 = sphi 0, %s74
    %s76 = sphi 0, %s74
    %s77 = sphi 0, %s76
    %s91 = sphi 0, %s77
    %s95 = sphi 0, %s95
    %s97 = sphi 0, %s95
    %s98 = sphi 0, %s97
    %s112 = sphi 0, %s98
    %s116 = sphi 0, %s116
    %s118 = sphi 0, %s116
    %s119 = sphi 0, %s118
    %s133 = sphi 0, %s119
    %s137 = sphi 0, %s137
    %s139 = sphi 0, %s137
    %s140 = sphi 0, %s139
    %s154 = sphi 0, %s140
    %s158 = sphi 0, %s158
    %s160 = sphi 0, %s158
    %s161 = sphi 0, %s160
    %s175 = sphi 0, %s161
    %s179 = sphi 0, %s179
    %s181 = sphi 0, %s179
    %s182 = sphi 0, %s181
    %s196 = sphi 0, %s182
    %s202 = sphi 0, %s204
    %s205 = sphi 0, %s202
    %s206 = sphi 0, %s205
    %s222 = sphi 0, %s206
  $region4: #{retinaface_forward.3} parent=0 // loop_header_branch
    %17 = sbr.rel (%p15) target = $region8
  $region5: #{retinaface_forward.3} parent=0 // loop_body
    %s19 = ssub.s32 %s14, 1
    %s20 = ssub.s32 %s14, 2
    %s21 = sadd.s32 %s14, 1
    %s22 = ssub.s32 %s14, %s21
    %p23 = scmp.eq.s32.totalorder %s22, 0
    %s25 = sadd.s32 %s24, 1
    %s26 = scalar_select %p23, %s24, %s25
    %p29 = pneg %p23
    %p30 = scmp.eq.s32.totalorder %s14, 1
    %p31 = por %p29, %p30
    %p32 = scmp.ne.s32.totalorder %s24, %s27
    %p33 = scmp.eq.s32.totalorder %s14, 0
    %p34 = por %p32, %p33
    %p35 = scmp.ne.s32.totalorder %s24, %s27
    %p36 = scmp.eq.s32.totalorder %s19, 1
    %p37 = por %p35, %p36
    %p38 = scmp.ne.s32.totalorder %s27, %s28
    %p39 = scmp.eq.s32.totalorder %s19, 0
    %p40 = por %p38, %p39
    %p41 = scmp.ne.s32.totalorder %s27, %s28
    %p42 = scmp.eq.s32.totalorder %s20, 1
    %p43 = por %p41, %p42
    %p45 = scmp.ne.s32.totalorder %s28, %s44
    %p46 = scmp.eq.s32.totalorder %s20, 0
    %p47 = por %p45, %p46
    %s48 = ssub.s32 %s14, %s21
    %p49 = scmp.eq.s32.totalorder %s48, 0
    %s51 = sadd.s32 %s50, 1
    %s52 = scalar_select %p49, %s50, %s51
    %p55 = pneg %p49
    %p56 = scmp.eq.s32.totalorder %s14, 1
    %p57 = por %p55, %p56
    %p58 = scmp.ne.s32.totalorder %s50, %s53
    %p59 = scmp.eq.s32.totalorder %s14, 0
    %p60 = por %p58, %p59
    %p61 = scmp.ne.s32.totalorder %s50, %s53
    %p62 = scmp.eq.s32.totalorder %s19, 1
    %p63 = por %p61, %p62
    %p64 = scmp.ne.s32.totalorder %s53, %s54
    %p65 = scmp.eq.s32.totalorder %s19, 0
    %p66 = por %p64, %p65
    %p67 = scmp.ne.s32.totalorder %s53, %s54
    %p68 = scmp.eq.s32.totalorder %s20, 1
    %p69 = por %p67, %p68
    %p71 = scmp.ne.s32.totalorder %s54, %s70
    %p72 = scmp.eq.s32.totalorder %s20, 0
    %p73 = por %p71, %p72
    %s75 = sadd.s32 %s74, 1
    %p78 = scmp.eq.s32.totalorder %s14, 1
    %p79 = scmp.ne.s32.totalorder %s74, %s76
    %p80 = scmp.eq.s32.totalorder %s14, 0
    %p81 = por %p79, %p80
    %p82 = scmp.ne.s32.totalorder %s74, %s76
    %p83 = scmp.eq.s32.totalorder %s19, 1
    %p84 = por %p82, %p83
    %p85 = scmp.ne.s32.totalorder %s76, %s77
    %p86 = scmp.eq.s32.totalorder %s19, 0
    %p87 = por %p85, %p86
    %p88 = scmp.ne.s32.totalorder %s76, %s77
    %p89 = scmp.eq.s32.totalorder %s20, 1
    %p90 = por %p88, %p89
    %p92 = scmp.ne.s32.totalorder %s77, %s91
    %p93 = scmp.eq.s32.totalorder %s20, 0
    %p94 = por %p92, %p93
    %s96 = sadd.s32 %s95, 1
    %p99 = scmp.eq.s32.totalorder %s14, 1
    %p100 = scmp.ne.s32.totalorder %s95, %s97
    %p101 = scmp.eq.s32.totalorder %s14, 0
    %p102 = por %p100, %p101
    %p103 = scmp.ne.s32.totalorder %s95, %s97
    %p104 = scmp.eq.s32.totalorder %s19, 1
    %p105 = por %p103, %p104
    %p106 = scmp.ne.s32.totalorder %s97, %s98
    %p107 = scmp.eq.s32.totalorder %s19, 0
    %p108 = por %p106, %p107
    %p109 = scmp.ne.s32.totalorder %s97, %s98
    %p110 = scmp.eq.s32.totalorder %s20, 1
    %p111 = por %p109, %p110
    %p113 = scmp.ne.s32.totalorder %s98, %s112
    %p114 = scmp.eq.s32.totalorder %s20, 0
    %p115 = por %p113, %p114
    %s117 = sadd.s32 %s116, 1
    %p120 = scmp.eq.s32.totalorder %s14, 1
    %p121 = scmp.ne.s32.totalorder %s116, %s118
    %p122 = scmp.eq.s32.totalorder %s14, 0
    %p123 = por %p121, %p122
    %p124 = scmp.ne.s32.totalorder %s116, %s118
    %p125 = scmp.eq.s32.totalorder %s19, 1
    %p126 = por %p124, %p125
    %p127 = scmp.ne.s32.totalorder %s118, %s119
    %p128 = scmp.eq.s32.totalorder %s19, 0
    %p129 = por %p127, %p128
    %p130 = scmp.ne.s32.totalorder %s118, %s119
    %p131 = scmp.eq.s32.totalorder %s20, 1
    %p132 = por %p130, %p131
    %p134 = scmp.ne.s32.totalorder %s119, %s133
    %p135 = scmp.eq.s32.totalorder %s20, 0
    %p136 = por %p134, %p135
    %s138 = sadd.s32 %s137, 1
    %p141 = scmp.eq.s32.totalorder %s14, 1
    %p142 = scmp.ne.s32.totalorder %s137, %s139
    %p143 = scmp.eq.s32.totalorder %s14, 0
    %p144 = por %p142, %p143
    %p145 = scmp.ne.s32.totalorder %s137, %s139
    %p146 = scmp.eq.s32.totalorder %s19, 1
    %p147 = por %p145, %p146
    %p148 = scmp.ne.s32.totalorder %s139, %s140
    %p149 = scmp.eq.s32.totalorder %s19, 0
    %p150 = por %p148, %p149
    %p151 = scmp.ne.s32.totalorder %s139, %s140
    %p152 = scmp.eq.s32.totalorder %s20, 1
    %p153 = por %p151, %p152
    %p155 = scmp.ne.s32.totalorder %s140, %s154
    %p156 = scmp.eq.s32.totalorder %s20, 0
    %p157 = por %p155, %p156
    %s159 = sadd.s32 %s158, 1
    %p162 = scmp.eq.s32.totalorder %s14, 1
    %p163 = scmp.ne.s32.totalorder %s158, %s160
    %p164 = scmp.eq.s32.totalorder %s14, 0
    %p165 = por %p163, %p164
    %p166 = scmp.ne.s32.totalorder %s158, %s160
    %p167 = scmp.eq.s32.totalorder %s19, 1
    %p168 = por %p166, %p167
    %p169 = scmp.ne.s32.totalorder %s160, %s161
    %p170 = scmp.eq.s32.totalorder %s19, 0
    %p171 = por %p169, %p170
    %p172 = scmp.ne.s32.totalorder %s160, %s161
    %p173 = scmp.eq.s32.totalorder %s20, 1
    %p174 = por %p172, %p173
    %p176 = scmp.ne.s32.totalorder %s161, %s175
    %p177 = scmp.eq.s32.totalorder %s20, 0
    %p178 = por %p176, %p177
    %s180 = sadd.s32 %s179, 1
    %p183 = scmp.eq.s32.totalorder %s14, 1
    %p184 = scmp.ne.s32.totalorder %s179, %s181
    %p185 = scmp.eq.s32.totalorder %s14, 0
    %p186 = por %p184, %p185
    %p187 = scmp.ne.s32.totalorder %s179, %s181
    %p188 = scmp.eq.s32.totalorder %s19, 1
    %p189 = por %p187, %p188
    %p190 = scmp.ne.s32.totalorder %s181, %s182
    %p191 = scmp.eq.s32.totalorder %s19, 0
    %p192 = por %p190, %p191
    %p193 = scmp.ne.s32.totalorder %s181, %s182
    %p194 = scmp.eq.s32.totalorder %s20, 1
    %p195 = por %p193, %p194
    %p197 = scmp.ne.s32.totalorder %s182, %s196
    %p198 = scmp.eq.s32.totalorder %s20, 0
    %p199 = por %p197, %p198
    %s200 = ssub.s32 %s14, %s21
    %p201 = scmp.eq.s32.totalorder %s200, 0
    %s203 = sadd.s32 %s202, 1
    %s204 = scalar_select %p201, %s202, %s203
    %p207 = pneg %p201
    %p208 = scmp.eq.s32.totalorder %s14, 1
    %p209 = por %p207, %p208
    %p210 = scmp.ne.s32.totalorder %s202, %s205
    %p211 = scmp.eq.s32.totalorder %s14, 0
    %p212 = por %p210, %p211
    %p213 = scmp.ne.s32.totalorder %s202, %s205
    %p214 = scmp.eq.s32.totalorder %s19, 1
    %p215 = por %p213, %p214
    %p216 = scmp.ne.s32.totalorder %s205, %s206
    %p217 = scmp.eq.s32.totalorder %s19, 0
    %p218 = por %p216, %p217
    %p219 = scmp.ne.s32.totalorder %s205, %s206
    %p220 = scmp.eq.s32.totalorder %s20, 1
    %p221 = por %p219, %p220
    %p223 = scmp.ne.s32.totalorder %s206, %s222
    %p224 = scmp.eq.s32.totalorder %s20, 0
    %p225 = por %p223, %p224
    %p226 = scmp.le.s32.totalorder 1, %s14
    %p227 = scmp.lt.s32.totalorder %s14, 3
    %p228 = pnand %p226, %p227
    %p229 = pneg %p228
    // Predicated region
    $region9: #{retinaface_forward.3} parent=5 // pred_check
      _
    $region10: #{retinaface_forward.3} parent=5 // pred_check_branch
      %231 = sbr.rel (%p228) target = $region12
    $region11: #{retinaface_forward.3} parent=5 // pred_region
      %s232 = ssub.s32 %s14, 1
      // Predicated region
      $region13: #{retinaface_forward.3} parent=11 // pred_check
        %p233 = pneg %p87
      $region14: #{retinaface_forward.3} parent=11 // pred_check_branch
        %235 = sbr.rel (%p233) target = $region16
      $region15: #{retinaface_forward.3} parent=11 // pred_region
        _
      $region16: #{retinaface_forward.3} parent=11 // pred_fallthru
        _
      // Predicated region
      $region17: #{retinaface_forward.3} parent=11 // pred_check
        %p236 = pneg %p108
      $region18: #{retinaface_forward.3} parent=11 // pred_check_branch
        %238 = sbr.rel (%p236) target = $region20
      $region19: #{retinaface_forward.3} parent=11 // pred_region
        _
      $region20: #{retinaface_forward.3} parent=11 // pred_fallthru
        _
      // Predicated region
      $region21: #{retinaface_forward.3} parent=11 // pred_check
        %p239 = pneg %p129
      $region22: #{retinaface_forward.3} parent=11 // pred_check_branch
        %241 = sbr.rel (%p239) target = $region24
      $region23: #{retinaface_forward.3} parent=11 // pred_region
        _
      $region24: #{retinaface_forward.3} parent=11 // pred_fallthru
        _
      // Predicated region
      $region25: #{retinaface_forward.3} parent=11 // pred_check
        %p242 = pneg %p150
      $region26: #{retinaface_forward.3} parent=11 // pred_check_branch
        %244 = sbr.rel (%p242) target = $region28
      $region27: #{retinaface_forward.3} parent=11 // pred_region
        _
      $region28: #{retinaface_forward.3} parent=11 // pred_fallthru
        _
      // Predicated region
      $region29: #{retinaface_forward.3} parent=11 // pred_check
        %p245 = pneg %p171
      $region30: #{retinaface_forward.3} parent=11 // pred_check_branch
        %247 = sbr.rel (%p245) target = $region32
      $region31: #{retinaface_forward.3} parent=11 // pred_region
        _
      $region32: #{retinaface_forward.3} parent=11 // pred_fallthru
        _
      // Predicated region
      $region33: #{retinaface_forward.3} parent=11 // pred_check
        %p248 = pneg %p192
      $region34: #{retinaface_forward.3} parent=11 // pred_check_branch
        %250 = sbr.rel (%p248) target = $region36
      $region35: #{retinaface_forward.3} parent=11 // pred_region
        _
      $region36: #{retinaface_forward.3} parent=11 // pred_fallthru
        _
    $region12: #{retinaface_forward.3} parent=5 // pred_fallthru
      _
    %p251 = scmp.lt.s32.totalorder %s14, 2
    // Predicated region
    $region37: #{retinaface_forward.3} parent=5 // pred_check
      %p252 = pneg %p251
    $region38: #{retinaface_forward.3} parent=5 // pred_check_branch
      %254 = sbr.rel (%p252) target = $region40
    $region39: #{retinaface_forward.3} parent=5 // pred_region
      // Predicated region
      $region41: #{retinaface_forward.3} parent=39 // pred_check
        %p255 = pneg %p34
      $region42: #{retinaface_forward.3} parent=39 // pred_check_branch
        %257 = sbr.rel (%p255) target = $region44
      $region43: #{retinaface_forward.3} parent=39 // pred_region
        %s258 = smul.u32 2, %s14
        %p259 = scmp.lt.s32.totalorder %s258, 3
        %s260 = scalar_select %p259, %s258, 3
        %s261 = smul.addr %s260, 8
        %s262 = scalar_lea.vmem %s0, %s261
        %s263 = smul.u32 2, %s14
      $region44: #{retinaface_forward.3} parent=39 // pred_fallthru
        _
      // Predicated region
      $region45: #{retinaface_forward.3} parent=39 // pred_check
        %p264 = pneg %p60
      $region46: #{retinaface_forward.3} parent=39 // pred_check_branch
        %266 = sbr.rel (%p264) target = $region48
      $region47: #{retinaface_forward.3} parent=39 // pred_region
        %s267 = smul.u32 2, %s14
        %p268 = scmp.lt.s32.totalorder %s267, 3
        %s269 = scalar_select %p268, %s267, 3
        %s270 = smul.addr %s269, 8
        %s271 = scalar_lea.vmem %s1, %s270
        %s272 = smul.u32 2, %s14
      $region48: #{retinaface_forward.3} parent=39 // pred_fallthru
        _
    $region40: #{retinaface_forward.3} parent=5 // pred_fallthru
      _
    %p273 = scmp.le.s32.totalorder 1, %s14
    %p274 = scmp.lt.s32.totalorder %s14, 3
    %p275 = pnand %p273, %p274
    %p276 = pneg %p275
    // Predicated region
    $region49: #{retinaface_forward.3} parent=5 // pred_check
      _
    $region50: #{retinaface_forward.3} parent=5 // pred_check_branch
      %278 = sbr.rel (%p275) target = $region52
    $region51: #{retinaface_forward.3} parent=5 // pred_region
      %s279 = ssub.s32 %s14, 1
      %s280 = smul.u32 2, %s19
      %p281 = scmp.lt.s32.totalorder %s280, 3
      %s282 = scalar_select %p281, %s280, 3
      %s283 = smul.addr %s282, 8
      %s284 = scalar_lea.vmem %s0, %s283
      %p285 = pneg %p40
      %p286 = pneg %p37
      %s287 = smul.u32 2, %s19
      %p288 = scmp.lt.s32.totalorder %s287, 3
      %s289 = scalar_select %p288, %s287, 3
      %s290 = smul.addr %s289, 8
      %s291 = scalar_lea.vmem %s1, %s290
      %p292 = pneg %p66
      %p293 = pneg %p63
      %p294 = pneg %p87
      %p295 = pneg %p84
      %p296 = pneg %p108
      %p297 = pneg %p105
      %p298 = pneg %p129
      %p299 = pneg %p126
      %p300 = pneg %p150
      %p301 = pneg %p147
      %p302 = pneg %p171
      %p303 = pneg %p168
      %p304 = pneg %p192
      %p305 = pneg %p189
      %p306 = pneg %p218
      %p307 = pneg %p215
      %s308 = smul.u32 2, %s19
      %p309 = scmp.lt.s32.totalorder %s308, 3
      %s310 = scalar_select %p309, %s308, 3
      %s311 = smul.addr %s310, 8
      %s312 = scalar_lea.vmem %s8, %s311
      %s313 = smul.u32 2, %s19
      %p314 = scmp.lt.s32.totalorder %s313, 3
      %s315 = scalar_select %p314, %s313, 3
      %s316 = smul.addr %s315, 8
      %s317 = scalar_lea.vmem %s0, %s316
      %s318 = smul.u32 2, %s19
      %s319 = smul.u32 2, %s19
      %p320 = scmp.lt.s32.totalorder %s319, 3
      %s321 = scalar_select %p320, %s319, 3
      %s322 = smul.addr %s321, 8
      %s323 = scalar_lea.vmem %s1, %s322
      %s324 = smul.u32 2, %s19
      %s325 = smul.u32 2, %s19
      %p326 = scmp.lt.s32.totalorder %s325, 3
      %s327 = scalar_select %p326, %s325, 3
      %s328 = smul.addr %s327, 8
      %s329 = scalar_lea.vmem %s8, %s328
      %s330 = smul.u32 2, %s19
      %v332 = vld [vmem:[%s317] sm:$0xff]
      %v333 = vld [vmem:[%s317 + $0x8] sm:$0xff]
      %v334 = vld [vmem:[%s2] sm:$0x7]
      %336 = vset.pattern.permute.xlu0 0
      %337 = vperm.xlu0 %336, %v332
      %v338 = vpop.permute.xlu0 %337
      %341 = vset.pattern.permute.xlu0 0
      %342 = vperm.xlu0 %341, %v333
      %v343 = vpop.permute.xlu0 %342
      %v345 = vlaneseq
      %v346 = vshrl.u32 %v345, 7
      %v347 = vsub.s32 0, %v346
      %v348 = vrot.slane %v334, %v347
      %v349 = vmul.f32 %v338, %v348
      %v350 = vmul.f32 %v343, %v348
      %351 = vset.pattern.permute.xlu0 1
      %352 = vperm.xlu0 %351, %v332
      %v353 = vpop.permute.xlu0 %352
      %355 = vset.pattern.permute.xlu0 1
      %356 = vperm.xlu0 %355, %v333
      %v357 = vpop.permute.xlu0 %356
      %v359 = vlaneseq
      %v360 = vshrl.u32 %v359, 7
      %v361 = vsub.s32 1, %v360
      %v362 = vrot.slane %v334, %v361
      %v363 = vmul.f32 %v353, %v362
      %v364 = vmul.f32 %v357, %v362
      %v365 = vadd.f32 %v349, %v363
      %v366 = vadd.f32 %v350, %v364
      %367 = vset.pattern.permute.xlu0 2
      %368 = vperm.xlu0 %367, %v332
      %v369 = vpop.permute.xlu0 %368
      %371 = vset.pattern.permute.xlu0 2
      %372 = vperm.xlu0 %371, %v333
      %v373 = vpop.permute.xlu0 %372
      %v375 = vlaneseq
      %v376 = vshrl.u32 %v375, 7
      %v377 = vsub.s32 2, %v376
      %v378 = vrot.slane %v334, %v377
      %v379 = vmul.f32 %v369, %v378
      %v380 = vmul.f32 %v373, %v378
      %v381 = vadd.f32 %v365, %v379
      %v382 = vadd.f32 %v366, %v380
      %v383 = vld [vmem:[%s3] sm:$0x1]
      %v385 = vlaneseq
      %v386 = vshrl.u32 %v385, 7
      %v387 = vsub.s32 0, %v386
      %v388 = vrot.slane %v383, %v387
      %v390 = vadd.f32 %v381, %v388
      %v391 = vadd.f32 %v382, %v388
      %v392 = vmul.f32 %v390, 0.1
      %v393 = vmul.f32 %v391, 0.1
      %v394 = vmax.f32 %v390, %v392
      %v395 = vmax.f32 %v391, %v393
      %v396 = vld [vmem:[%s4] sm:$0xf]
      %v397 = vld [vmem:[%s4 + $0x4] sm:$0xf]
      %v398 = vld [vmem:[%s4 + $0x8] sm:$0xf]
      %v399 = vld [vmem:[%s4 + $0xc] sm:$0xf]
      %v400 = vld [vmem:[%s4 + $0x10] sm:$0xf]
      %v401 = vld [vmem:[%s4 + $0x14] sm:$0xf]
      %v402 = vld [vmem:[%s4 + $0x18] sm:$0xf]
      %v403 = vld [vmem:[%s4 + $0x1c] sm:$0xf]
      %v404 = vld [vmem:[%s4 + $0x20] sm:$0xf]
      %v405 = vld [vmem:[%s4 + $0x24] sm:$0xf]
      %v406 = vld [vmem:[%s4 + $0x28] sm:$0xf]
      %v407 = vld [vmem:[%s4 + $0x2c] sm:$0xf]
      %v408 = vld [vmem:[%s4 + $0x30] sm:$0xf]
      %v409 = vld [vmem:[%s4 + $0x34] sm:$0xf]
      %v410 = vld [vmem:[%s4 + $0x38] sm:$0xf]
      %v411 = vld [vmem:[%s4 + $0x3c] sm:$0xf]
      %v412 = vpack.c.bf16 %v395, %v394
      %v413 = vld [vmem:[%s5] sm:$0x1]
      %v415 = vlaneseq
      %v416 = vshrl.u32 %v415, 7
      %v417 = vsub.s32 0, %v416
      %v418 = vrot.slane %v413, %v417
      %v436 = vunpack.c.l.b16 %v396
      %v437 = vunpack.c.l.b16 %v397
      %v438 = vunpack.c.l.b16 %v398
      %v439 = vunpack.c.l.b16 %v399
      %v440 = vunpack.c.l.b16 %v400
      %v441 = vunpack.c.l.b16 %v401
      %v442 = vunpack.c.l.b16 %v402
      %v443 = vunpack.c.l.b16 %v403
      %v444 = vunpack.c.l.b16 %v404
      %v445 = vunpack.c.l.b16 %v405
      %v446 = vunpack.c.l.b16 %v406
      %v447 = vunpack.c.l.b16 %v407
      %v448 = vunpack.c.l.b16 %v408
      %v449 = vunpack.c.l.b16 %v409
      %v450 = vunpack.c.l.b16 %v410
      %v451 = vunpack.c.l.b16 %v411
      %v452 = vpack.c.b16 %v437, %v436
      %v453 = vpack.c.b16 %v439, %v438
      %v454 = vpack.c.b16 %v441, %v440
      %v455 = vpack.c.b16 %v443, %v442
      %v456 = vpack.c.b16 %v445, %v444
      %v457 = vpack.c.b16 %v447, %v446
      %v458 = vpack.c.b16 %v449, %v448
      %v459 = vpack.c.b16 %v451, %v450
      %468 = vmatprep.subr.bf16.mxu0 0
      %469 = vmatpush1.bf16.msra.mxu0 %v452
      %470 = vmatprep.subr.bf16.mxu0 0
      %471 = vmatpush1.bf16.msra.mxu0 %v453
      %472 = vmatprep.subr.bf16.mxu0 0
      %473 = vmatpush1.bf16.msra.mxu0 %v454
      %474 = vmatprep.subr.bf16.mxu0 0
      %475 = vmatpush1.bf16.msra.mxu0 %v455
      %476 = vmatprep.subr.bf16.mxu0 0
      %477 = vmatpush1.bf16.msra.mxu0 %v456
      %478 = vmatprep.subr.bf16.mxu0 0
      %479 = vmatpush1.bf16.msra.mxu0 %v457
      %480 = vmatprep.subr.bf16.mxu0 0
      %481 = vmatpush1.bf16.msra.mxu0 %v458
      %482 = vmatprep.subr.bf16.mxu0 0
      %483 = vmatpush1.bf16.msra.mxu0 %v459
      %484 = vmatprep.subr.bf16.mxu0 0
      %485 = vmatpush1.bf16.msra.mxu0 0
      %486 = vmatprep.subr.bf16.mxu0 0
      %487 = vmatpush1.bf16.msra.mxu0 0
      %488 = vmatprep.subr.bf16.mxu0 0
      %489 = vmatpush1.bf16.msra.mxu0 0
      %490 = vmatprep.subr.bf16.mxu0 0
      %491 = vmatpush1.bf16.msra.mxu0 0
      %492 = vmatprep.subr.bf16.mxu0 0
      %493 = vmatpush1.bf16.msra.mxu0 0
      %494 = vmatprep.subr.bf16.mxu0 0
      %495 = vmatpush1.bf16.msra.mxu0 0
      %496 = vmatprep.subr.bf16.mxu0 0
      %497 = vmatpush1.bf16.msra.mxu0 0
      %498 = vmatprep.subr.bf16.mxu0 0
      %499 = vmatpush1.bf16.msra.mxu0 0
      %500 = vmatprep.mubr.bf16.mxu0 0
      %501 = vmatmul.mubr.bf16.gmra.mrb[0].mxu0 %v412
      %v502 = vpop.f32.mrb[0].mxu0
      %v503 = vadd.f32 %v418, %v502
      %v504 = vpop.f32.mrb[0].mxu0
      %v505 = vpop.f32.mrb[0].mxu0
      %v506 = vadd.f32 %v418, %v505
      %v507 = vpop.f32.mrb[0].mxu0
      %508 = vdwg.mxu0
      %v509 = vmul.f32 %v503, 0.1
      %v510 = vmul.f32 %v506, 0.1
      %v511 = vmax.f32 %v503, %v509
      %v512 = vmax.f32 %v506, %v510
      %v513 = vld [vmem:[%s323] sm:$0xff]
      %v514 = vld [vmem:[%s323 + $0x8] sm:$0xff]
      %v515 = vadd.f32 %v511, %v513
      %v516 = vadd.f32 %v512, %v514
      %v517 = vld [vmem:[%s6] sm:$0xf]
      %v518 = vld [vmem:[%s6 + $0x4] sm:$0xf]
      %v519 = vld [vmem:[%s6 + $0x8] sm:$0xf]
      %v520 = vld [vmem:[%s6 + $0xc] sm:$0xf]
      %v521 = vld [vmem:[%s6 + $0x10] sm:$0xf]
      %v522 = vld [vmem:[%s6 + $0x14] sm:$0xf]
      %v523 = vld [vmem:[%s6 + $0x18] sm:$0xf]
      %v524 = vld [vmem:[%s6 + $0x1c] sm:$0xf]
      %v525 = vld [vmem:[%s6 + $0x20] sm:$0xf]
      %v526 = vld [vmem:[%s6 + $0x24] sm:$0xf]
      %v527 = vld [vmem:[%s6 + $0x28] sm:$0xf]
      %v528 = vld [vmem:[%s6 + $0x2c] sm:$0xf]
      %v529 = vld [vmem:[%s6 + $0x30] sm:$0xf]
      %v530 = vld [vmem:[%s6 + $0x34] sm:$0xf]
      %v531 = vld [vmem:[%s6 + $0x38] sm:$0xf]
      %v532 = vld [vmem:[%s6 + $0x3c] sm:$0xf]
      %v533 = vpack.c.bf16 %v516, %v515
      %v534 = vld [vmem:[%s7] sm:$0x1]
      %v536 = vlaneseq
      %v537 = vshrl.u32 %v536, 7
      %v538 = vsub.s32 0, %v537
      %v539 = vrot.slane %v534, %v538
      %v557 = vunpack.c.l.b16 %v517
      %v558 = vunpack.c.l.b16 %v518
      %v559 = vunpack.c.l.b16 %v519
      %v560 = vunpack.c.l.b16 %v520
      %v561 = vunpack.c.l.b16 %v521
      %v562 = vunpack.c.l.b16 %v522
      %v563 = vunpack.c.l.b16 %v523
      %v564 = vunpack.c.l.b16 %v524
      %v565 = vunpack.c.l.b16 %v525
      %v566 = vunpack.c.l.b16 %v526
      %v567 = vunpack.c.l.b16 %v527
      %v568 = vunpack.c.l.b16 %v528
      %v569 = vunpack.c.l.b16 %v529
      %v570 = vunpack.c.l.b16 %v530
      %v571 = vunpack.c.l.b16 %v531
      %v572 = vunpack.c.l.b16 %v532
      %v573 = vpack.c.b16 %v558, %v557
      %v574 = vpack.c.b16 %v560, %v559
      %v575 = vpack.c.b16 %v562, %v561
      %v576 = vpack.c.b16 %v564, %v563
      %v577 = vpack.c.b16 %v566, %v565
      %v578 = vpack.c.b16 %v568, %v567
      %v579 = vpack.c.b16 %v570, %v569
      %v580 = vpack.c.b16 %v572, %v571
      %589 = vmatprep.subr.bf16.mxu0 0
      %590 = vmatpush1.bf16.msra.mxu0 %v573
      %591 = vmatprep.subr.bf16.mxu0 0
      %592 = vmatpush1.bf16.msra.mxu0 %v574
      %593 = vmatprep.subr.bf16.mxu0 0
      %594 = vmatpush1.bf16.msra.mxu0 %v575
      %595 = vmatprep.subr.bf16.mxu0 0
      %596 = vmatpush1.bf16.msra.mxu0 %v576
      %597 = vmatprep.subr.bf16.mxu0 0
      %598 = vmatpush1.bf16.msra.mxu0 %v577
      %599 = vmatprep.subr.bf16.mxu0 0
      %600 = vmatpush1.bf16.msra.mxu0 %v578
      %601 = vmatprep.subr.bf16.mxu0 0
      %602 = vmatpush1.bf16.msra.mxu0 %v579
      %603 = vmatprep.subr.bf16.mxu0 0
      %604 = vmatpush1.bf16.msra.mxu0 %v580
      %605 = vmatprep.subr.bf16.mxu0 0
      %606 = vmatpush1.bf16.msra.mxu0 0
      %607 = vmatprep.subr.bf16.mxu0 0
      %608 = vmatpush1.bf16.msra.mxu0 0
      %609 = vmatprep.subr.bf16.mxu0 0
      %610 = vmatpush1.bf16.msra.mxu0 0
      %611 = vmatprep.subr.bf16.mxu0 0
      %612 = vmatpush1.bf16.msra.mxu0 0
      %613 = vmatprep.subr.bf16.mxu0 0
      %614 = vmatpush1.bf16.msra.mxu0 0
      %615 = vmatprep.subr.bf16.mxu0 0
      %616 = vmatpush1.bf16.msra.mxu0 0
      %617 = vmatprep.subr.bf16.mxu0 0
      %618 = vmatpush1.bf16.msra.mxu0 0
      %619 = vmatprep.subr.bf16.mxu0 0
      %620 = vmatpush1.bf16.msra.mxu0 0
      %621 = vmatprep.mubr.bf16.mxu0 0
      %622 = vmatmul.mubr.bf16.gmra.mrb[0].mxu0 %v533
      %v623 = vpop.f32.mrb[0].mxu0
      %v624 = vadd.f32 %v539, %v623
      %v625 = vpop.f32.mrb[0].mxu0
      %v626 = vpop.f32.mrb[0].mxu0
      %v627 = vadd.f32 %v539, %v626
      %v628 = vpop.f32.mrb[0].mxu0
      %629 = vdwg.mxu0
      %630 = vst [vmem:[%s329] sm:$0xff] %v624
      %631 = vst [vmem:[%s329 + $0x8] sm:$0xff] %v627
      %s632 = smul.u32 2, %s19
      %p633 = scmp.lt.s32.totalorder %s632, 3
      %s634 = scalar_select %p633, %s632, 3
      %s635 = smul.addr %s634, 8
      %s636 = scalar_lea.vmem %s8, %s635
      // Predicated region
      $region53: #{retinaface_forward.3} parent=51 // pred_check
        %p637 = pneg %p215
      $region54: #{retinaface_forward.3} parent=51 // pred_check_branch
        %639 = sbr.rel (%p637) target = $region56
      $region55: #{retinaface_forward.3} parent=51 // pred_region
        %s640 = smul.u32 2, %s19
      $region56: #{retinaface_forward.3} parent=51 // pred_fallthru
        _
    $region52: #{retinaface_forward.3} parent=5 // pred_fallthru
      _
    %p641 = scmp.le.s32.totalorder 2, %s14
    // Predicated region
    $region57: #{retinaface_forward.3} parent=5 // pred_check
      %p642 = pneg %p641
    $region58: #{retinaface_forward.3} parent=5 // pred_check_branch
      %644 = sbr.rel (%p642) target = $region60
    $region59: #{retinaface_forward.3} parent=5 // pred_region
      %s645 = ssub.s32 %s14, 2
      // Predicated region
      $region61: #{retinaface_forward.3} parent=59 // pred_check
        %p646 = pneg %p221
      $region62: #{retinaface_forward.3} parent=59 // pred_check_branch
        %648 = sbr.rel (%p646) target = $region64
      $region63: #{retinaface_forward.3} parent=59 // pred_region
        %s649 = smul.u32 2, %s20
        %p650 = scmp.lt.s32.totalorder %s649, 3
        %s651 = scalar_select %p650, %s649, 3
        %s652 = smul.addr %s651, 8
        %s653 = scalar_lea.vmem %s8, %s652
      $region64: #{retinaface_forward.3} parent=59 // pred_fallthru
        _
    $region60: #{retinaface_forward.3} parent=5 // pred_fallthru
      _
  $region6: #{retinaface_forward.3} parent=0 // loop_footer
    %s18 = sadd.s32 1, %s14
  $region7: #{retinaface_forward.3} parent=0 // loop_footer_branch
    %13 = sbr.rel target = $region3
  $region8: #{retinaface_forward.3} parent=0 // loop_exit
    _

</llo_original>
